<compile_context>
chip_gen: v7x
topology: tpu7x:2x2x1
jax: 0.10.0
libtpu: 0.0.40
codegen_flags: <defaults>
</compile_context>

<pallas_src>
import functools

import jax
import jax.numpy as jnp
from jax.experimental import pallas as pl
from jax.experimental.pallas import tpu as pltpu

F32 = jnp.float32
BF16 = jnp.bfloat16

LANE = 128
TM = 256                       # node-row tile for the conv stages
TK_MAX = 1024                  # aggregation K tile (amortizes per-grid-step overhead)
VMEM_BUDGET = 48 * 1024 * 1024  # sized against v7x's 64 MiB/TC (also fine on v5e/v6e)


def _round_up(n, m):
    return ((n + m - 1) // m) * m


# --------------------------------- kernels ----------------------------------

def encoder_kernel(x_ref, w1_ref, b1_ref, w2_ref, b2_ref, h_ref):
    """Linear -> ReLU -> Linear -> ReLU on a (TM_enc, Fin) node-row tile (bf16 MXU, f32 acc)."""
    h = jnp.dot(x_ref[...], w1_ref[...], preferred_element_type=F32) + b1_ref[...]
    h = jnp.maximum(h, 0.0)
    h = jnp.dot(h.astype(BF16), w2_ref[...], preferred_element_type=F32) + b2_ref[...]
    h_ref[...] = jnp.maximum(h, 0.0).astype(h_ref.dtype)


def _aggregate(a_ref, hsrc_ref, acc_ref, *, tk, hsrc_resident):
    """One K step of the mean aggregation: acc += A_counts_tile @ h_src_tile (f32 acc)."""
    k = pl.program_id(1)

    @pl.when(k == 0)
    def _():
        acc_ref[...] = jnp.zeros_like(acc_ref)

    if hsrc_resident:
        start = pl.multiple_of(k * tk, tk)
        hs = hsrc_ref[pl.ds(start, tk), :]
    else:
        hs = hsrc_ref[...]
    # int8 0/1-count tile cast to bf16 on the VPU (hidden under the A DMA), MXU bf16 dot.
    acc_ref[...] += jnp.dot(a_ref[...].astype(BF16), hs, preferred_element_type=F32)


def sage_kernel(a_ref, hsrc_ref, hroot_ref, inv_ref, wl_ref, wr_ref, b_ref,
                o_ref, acc_ref, *, tk, hsrc_resident):
    """One SAGEConv (mean aggregation) + ReLU.  grid = (row tiles, K tiles)."""
    _aggregate(a_ref, hsrc_ref, acc_ref, tk=tk, hsrc_resident=hsrc_resident)

    @pl.when(pl.program_id(1) == pl.num_programs(1) - 1)
    def _():
        agg = (acc_ref[...] * inv_ref[...]).astype(BF16)       # exact f32 mean, then bf16
        h = (jnp.dot(agg, wl_ref[...], preferred_element_type=F32)
             + jnp.dot(hroot_ref[...], wr_ref[...], preferred_element_type=F32)
             + b_ref[...])
        o_ref[...] = jnp.maximum(h, 0.0).astype(o_ref.dtype)


def sage_readout_kernel(a_ref, hsrc_ref, hroot_ref, inv_ref, wl_ref, wr_ref, b_ref,
                        w3_ref, b3_ref, w4_ref, b4_ref, o_ref, acc_ref,
                        *, tk, hsrc_resident):
    """Second SAGEConv + ReLU fused with the readout MLP (Linear -> ReLU -> Linear)."""
    _aggregate(a_ref, hsrc_ref, acc_ref, tk=tk, hsrc_resident=hsrc_resident)

    @pl.when(pl.program_id(1) == pl.num_programs(1) - 1)
    def _():
        agg = (acc_ref[...] * inv_ref[...]).astype(BF16)
        h = (jnp.dot(agg, wl_ref[...], preferred_element_type=F32)
             + jnp.dot(hroot_ref[...], wr_ref[...], preferred_element_type=F32)
             + b_ref[...])
        h = jnp.maximum(h, 0.0)
        h = jnp.dot(h.astype(BF16), w3_ref[...], preferred_element_type=F32) + b3_ref[...]
        h = jnp.maximum(h, 0.0)
        o_ref[...] = (jnp.dot(h.astype(BF16), w4_ref[...], preferred_element_type=F32)
                      + b4_ref[...])


# --------------------------------- wrapper ----------------------------------

def pbsage_forward(x, edge_index, params, *, num_nodes):
    """x: [N, input_dim] f32; edge_index: [2, E] int32 (row 0 = src, row 1 = dst)."""
    N = num_nodes
    fin = x.shape[1]
    h2 = params["w1"].shape[1]        # hidden // 2
    hid = params["w2"].shape[1]       # hidden
    out_dim = params["w4"].shape[1]
    out_pad = _round_up(out_dim, LANE)

    # Node-row padding: >= 2 row tiles (feeds both v7x TensorCores) and a multiple of TK.
    n_pad = _round_up(max(N, 2 * TM), TM)
    tk = min(TK_MAX, n_pad)
    n_pad = _round_up(n_pad, tk)
    n_rt = n_pad // TM
    n_kt = n_pad // tk

    # ---- VMEM budgeting: resident h_src when it fits the v7x-safe budget ----
    a_tile_bytes = 2 * TM * tk                                   # int8 A tile, double-buffered
    hroot_bytes = 2 * TM * hid * 2                               # bf16, double-buffered
    out_bytes = 2 * TM * max(hid * 2, out_pad * 4)               # double-buffered
    acc_bytes = TM * hid * 4
    weight_bytes = 2 * (2 * hid * hid * 2 + hid * h2 * 2 + h2 * out_pad * 2
                        + 4 * (hid + h2 + out_pad))
    fixed_bytes = a_tile_bytes + hroot_bytes + out_bytes + acc_bytes + weight_bytes + (1 << 20)
    hsrc_res_bytes = 2 * n_pad * hid * 2                         # worst case: 2 pipeline bufs
    hsrc_resident = fixed_bytes + hsrc_res_bytes <= VMEM_BUDGET
    conv_vmem = fixed_bytes + (hsrc_res_bytes if hsrc_resident else 2 * tk * hid * 2)
    vmem_limit = int(min(max(conv_vmem + (4 << 20), 32 << 20), 56 << 20))

    # ---- layout plumbing in plain JAX: bf16 inputs/weights, int8 adjacency counts ----
    x_p = jnp.zeros((n_pad, fin), F32).at[:N, :].set(x).astype(BF16)

    # Dense adjacency built directly in int8 (no f32 N^2 transient); exact mean via f32 1/deg.
    # NOTE: >127 duplicate edges per (dst, src) pair would overflow int8 (not a realistic case).
    src, dst = edge_index[0], edge_index[1]
    A = jnp.zeros((n_pad, n_pad), jnp.int8).at[dst, src].add(jnp.ones((), jnp.int8))
    deg = jnp.sum(A, axis=1, keepdims=True, dtype=jnp.int32).astype(F32)
    inv_deg = 1.0 / jnp.maximum(deg, 1.0)                        # (n_pad, 1) f32

    w1 = params["w1"].astype(BF16)
    w2 = params["w2"].astype(BF16)
    wl1 = params["wl1"].astype(BF16)
    wr1 = params["wr1"].astype(BF16)
    wl2 = params["wl2"].astype(BF16)
    wr2 = params["wr2"].astype(BF16)
    w3 = params["w3"].astype(BF16)
    w4 = jnp.zeros((h2, out_pad), F32).at[:, :out_dim].set(params["w4"]).astype(BF16)
    b4 = jnp.zeros((1, out_pad), F32).at[:, :out_dim].set(params["b4"])

    def full(shp):  # small weight/bias arrays: one untiled block, same for every grid step
        return pl.BlockSpec(shp, lambda *_: (0,) * len(shp))

    # ---- stage 1: encoder (row-tiled, parallel; x kept lane-unpadded at fin columns) ----
    tm_enc = min(n_pad // 2, 1024)
    h0 = pl.pallas_call(
        encoder_kernel,
        out_shape=jax.ShapeDtypeStruct((n_pad, hid), BF16),
        grid=(n_pad // tm_enc,),
        in_specs=[
            pl.BlockSpec((tm_enc, fin), lambda i: (i, 0)),
            full((fin, h2)), full((1, h2)),
            full((h2, hid)), full((1, hid)),
        ],
        out_specs=pl.BlockSpec((tm_enc, hid), lambda i: (i, 0)),
        compiler_params=pltpu.CompilerParams(dimension_semantics=("parallel",)),
        cost_estimate=pl.CostEstimate(
            flops=2 * n_pad * (fin * h2 + h2 * hid),
            transcendentals=0,
            bytes_accessed=2 * n_pad * (fin + hid)
                           + 2 * (fin * h2 + h2 * hid) + 4 * (h2 + hid)),
    )(x_p, w1, params["b1"], w2, params["b2"])

    # ---- shared conv plumbing ----
    conv_params = pltpu.CompilerParams(
        dimension_semantics=("parallel", "arbitrary"),
        vmem_limit_bytes=vmem_limit,
    )
    if hsrc_resident:
        hsrc_spec = pl.BlockSpec((n_pad, hid), lambda i, k: (0, 0))   # VMEM-resident
    else:
        hsrc_spec = pl.BlockSpec((tk, hid), lambda i, k: (k, 0))      # streamed per K tile

    a_spec = pl.BlockSpec((TM, tk), lambda i, k: (i, k))
    hroot_spec = pl.BlockSpec((TM, hid), lambda i, k: (i, 0))
    inv_spec = pl.BlockSpec((TM, 1), lambda i, k: (i, 0))

    agg_flops = 2 * n_pad * n_pad * hid
    lin_flops = 2 * n_pad * (2 * hid) * hid
    hsrc_traffic = (1 if hsrc_resident else n_rt) * n_pad * hid * 2
    agg_bytes = n_pad * n_pad + hsrc_traffic + 2 * n_pad * hid + 4 * n_pad  # A + hsrc + hroot + inv

    # ---- stage 2: SAGEConv 1 + ReLU ----
    h1 = pl.pallas_call(
        functools.partial(sage_kernel, tk=tk, hsrc_resident=hsrc_resident),
        out_shape=jax.ShapeDtypeStruct((n_pad, hid), BF16),
        grid=(n_rt, n_kt),
        in_specs=[
            a_spec, hsrc_spec, hroot_spec, inv_spec,
            full((hid, hid)), full((hid, hid)), full((1, hid)),
        ],
        out_specs=pl.BlockSpec((TM, hid), lambda i, k: (i, 0)),
        scratch_shapes=[pltpu.VMEM((TM, hid), F32)],
        compiler_params=conv_params,
        cost_estimate=pl.CostEstimate(
            flops=agg_flops + lin_flops,
            transcendentals=0,
            bytes_accessed=agg_bytes + 2 * n_pad * hid + 2 * 2 * hid * hid + 4 * hid),
    )(A, h0, h0, inv_deg, wl1, wr1, params["bl1"])

    # ---- stage 3: SAGEConv 2 + ReLU fused with readout MLP ----
    out_p = pl.pallas_call(
        functools.partial(sage_readout_kernel, tk=tk, hsrc_resident=hsrc_resident),
        out_shape=jax.ShapeDtypeStruct((n_pad, out_pad), F32),
        grid=(n_rt, n_kt),
        in_specs=[
            a_spec, hsrc_spec, hroot_spec, inv_spec,
            full((hid, hid)), full((hid, hid)), full((1, hid)),
            full((hid, h2)), full((1, h2)),
            full((h2, out_pad)), full((1, out_pad)),
        ],
        out_specs=pl.BlockSpec((TM, out_pad), lambda i, k: (i, 0)),
        scratch_shapes=[pltpu.VMEM((TM, hid), F32)],
        compiler_params=conv_params,
        cost_estimate=pl.CostEstimate(
            flops=agg_flops + lin_flops + 2 * n_pad * (hid * h2 + h2 * out_pad),
            transcendentals=0,
            bytes_accessed=agg_bytes + 4 * n_pad * out_pad
                           + 2 * (2 * hid * hid + hid * h2 + h2 * out_pad)
                           + 4 * (hid + h2 + out_pad)),
    )(A, h1, h1, inv_deg, wl2, wr2, params["bl2"],
      w3, params["b3"], w4, b4)

    return out_p[:N, :out_dim]


# ------------------------------ params / reference ---------------------------

def init_params(key, input_dim=24, hidden_dim=256, output_dim=12):
    """Deterministic init; biases kept as [1, out] 2-D rows for TPU-friendly broadcast."""
    h2 = hidden_dim // 2
    shapes = {
        # encoder
        "w1": (input_dim, h2), "b1": (1, h2),
        "w2": (h2, hidden_dim), "b2": (1, hidden_dim),
        # SAGEConv 1 (lin_l has bias, lin_r has none — PyG default)
        "wl1": (hidden_dim, hidden_dim), "bl1": (1, hidden_dim),
        "wr1": (hidden_dim, hidden_dim),
        # SAGEConv 2
        "wl2": (hidden_dim, hidden_dim), "bl2": (1, hidden_dim),
        "wr2": (hidden_dim, hidden_dim),
        # readout
        "w3": (hidden_dim, h2), "b3": (1, h2),
        "w4": (h2, output_dim), "b4": (1, output_dim),
    }
    params = {}
    keys = jax.random.split(key, len(shapes))
    for (name, shape), k in zip(shapes.items(), keys):
        fan_in = shape[0] if name.startswith("w") else shape[1]
        bound = 1.0 / jnp.sqrt(jnp.float32(fan_in))
        params[name] = jax.random.uniform(k, shape, jnp.float32, -bound, bound)
    return params


def pbsage_reference(x, edge_index, params, *, num_nodes):
    """Pure-JAX f32 reference for correctness checking."""
    N = num_nodes
    A = jnp.zeros((N, N), jnp.float32).at[edge_index[1], edge_index[0]].add(1.0)
    A = A / jnp.maximum(A.sum(axis=1, keepdims=True), 1.0)
    relu = lambda v: jnp.maximum(v, 0.0)
    h = relu(x @ params["w1"] + params["b1"])
    h = relu(h @ params["w2"] + params["b2"])
    h = relu((A @ h) @ params["wl1"] + params["bl1"] + h @ params["wr1"])
    h = relu((A @ h) @ params["wl2"] + params["bl2"] + h @ params["wr2"])
    h = relu(h @ params["w3"] + params["b3"])
    return h @ params["w4"] + params["b4"]


if __name__ == "__main__":
    INPUT_DIM, HIDDEN_DIM, OUTPUT_DIM = 24, 256, 12
    N_NODES, N_EDGES = 16, 48

    key = jax.random.PRNGKey(0)
    k_x, k_src, k_dst, k_p = jax.random.split(key, 4)

    x = jax.random.normal(k_x, (N_NODES, INPUT_DIM), jnp.float32)
    src = jax.random.randint(k_src, (N_EDGES,), 0, N_NODES, jnp.int32)
    dst = jax.random.randint(k_dst, (N_EDGES,), 0, N_NODES, jnp.int32)
    edge_index = jnp.stack([src, dst], axis=0)

    params = init_params(k_p, INPUT_DIM, HIDDEN_DIM, OUTPUT_DIM)

    out = pbsage_forward(x, edge_index, params, num_nodes=N_NODES)
    out = jax.block_until_ready(out)

    ref = pbsage_reference(x, edge_index, params, num_nodes=N_NODES)
    assert out.shape == (N_NODES, OUTPUT_DIM)
    # bf16 MXU operands with f32 accumulation -> ~1e-2-level relative error vs f32 reference.
    assert jnp.allclose(out, ref, atol=5e-2, rtol=5e-2), float(jnp.max(jnp.abs(out - ref)))

    print("KERNEL_OK")
</pallas_src>

<mosaic_0001>
module attributes {stable_mosaic.version = 11 : i64} {
  func.func @encoder_kernel(%arg0: i32, %arg1: memref<256x24xbf16, #tpu.memory_space<vmem>>, %arg2: memref<24x128xbf16, #tpu.memory_space<vmem>>, %arg3: memref<1x128xf32, #tpu.memory_space<vmem>>, %arg4: memref<128x256xbf16, #tpu.memory_space<vmem>>, %arg5: memref<1x256xf32, #tpu.memory_space<vmem>>, %arg6: memref<256x256xbf16, #tpu.memory_space<vmem>>) attributes {dimension_semantics = [#tpu.dimension_semantics<parallel>], iteration_bounds = array<i64: 2>, scalar_prefetch = 0 : i64, scratch_operands = 0 : i64, tpu.core_type = #tpu.core_type<tc>, window_params = [{transform_indices = @transform_0, window_bounds = array<i64: 256, 24>}, {pipeline_mode = #tpu.pipeline_mode<synchronous>, transform_indices = @transform_1, window_bounds = array<i64: 24, 128>}, {pipeline_mode = #tpu.pipeline_mode<synchronous>, transform_indices = @transform_2, window_bounds = array<i64: 1, 128>}, {pipeline_mode = #tpu.pipeline_mode<synchronous>, transform_indices = @transform_3, window_bounds = array<i64: 128, 256>}, {pipeline_mode = #tpu.pipeline_mode<synchronous>, transform_indices = @transform_4, window_bounds = array<i64: 1, 256>}, {transform_indices = @transform_5, window_bounds = array<i64: 256, 256>}]} {
    %c0 = arith.constant 0 : index
    %c0_0 = arith.constant 0 : index
    %0 = vector.load %arg1[%c0, %c0_0] : memref<256x24xbf16, #tpu.memory_space<vmem>>, vector<256x24xbf16>
    %c0_1 = arith.constant 0 : index
    %c0_2 = arith.constant 0 : index
    %1 = vector.load %arg2[%c0_1, %c0_2] : memref<24x128xbf16, #tpu.memory_space<vmem>>, vector<24x128xbf16>
    %cst = arith.constant dense<0.000000e+00> : vector<256x128xf32>
    %2 = tpu.matmul %0, %1, %cst {dimension_numbers = #tpu.dot_dimension_numbers<[1], [0], [0], [1], [0, 0, 1, 1], [], []>} : vector<256x24xbf16>, vector<24x128xbf16>, vector<256x128xf32> -> vector<256x128xf32>
    %c0_3 = arith.constant 0 : index
    %c0_4 = arith.constant 0 : index
    %3 = vector.load %arg3[%c0_3, %c0_4] : memref<1x128xf32, #tpu.memory_space<vmem>>, vector<1x128xf32>
    %4 = vector.broadcast %3 : vector<1x128xf32> to vector<256x128xf32>
    %5 = arith.addf %2, %4 : vector<256x128xf32>
    %cst_5 = arith.constant 0.000000e+00 : f32
    %6 = vector.broadcast %cst_5 : f32 to vector<256x128xf32>
    %7 = arith.maximumf %5, %6 : vector<256x128xf32>
    %8 = arith.truncf %7 : vector<256x128xf32> to vector<256x128xbf16>
    %c0_6 = arith.constant 0 : index
    %c0_7 = arith.constant 0 : index
    %9 = vector.load %arg4[%c0_6, %c0_7] : memref<128x256xbf16, #tpu.memory_space<vmem>>, vector<128x256xbf16>
    %cst_8 = arith.constant dense<0.000000e+00> : vector<256x256xf32>
    %10 = tpu.matmul %8, %9, %cst_8 {dimension_numbers = #tpu.dot_dimension_numbers<[1], [0], [0], [1], [0, 0, 1, 1], [], []>} : vector<256x128xbf16>, vector<128x256xbf16>, vector<256x256xf32> -> vector<256x256xf32>
    %c0_9 = arith.constant 0 : index
    %c0_10 = arith.constant 0 : index
    %11 = vector.load %arg5[%c0_9, %c0_10] : memref<1x256xf32, #tpu.memory_space<vmem>>, vector<1x256xf32>
    %12 = vector.broadcast %11 : vector<1x256xf32> to vector<256x256xf32>
    %13 = arith.addf %10, %12 : vector<256x256xf32>
    %cst_11 = arith.constant 0.000000e+00 : f32
    %14 = vector.broadcast %cst_11 : f32 to vector<256x256xf32>
    %15 = arith.maximumf %13, %14 : vector<256x256xf32>
    %16 = arith.truncf %15 : vector<256x256xf32> to vector<256x256xbf16>
    %c0_12 = arith.constant 0 : index
    %c0_13 = arith.constant 0 : index
    %17 = vector.load %arg6[%c0_12, %c0_13] : memref<256x256xbf16, #tpu.memory_space<vmem>>, vector<256x256xbf16>
    tpu.vector_store %arg6[%c0_12, %c0_13], %16 {strides = array<i32>} : memref<256x256xbf16, #tpu.memory_space<vmem>>, vector<256x256xbf16>,
    return
  }
  func.func @transform_0(%arg0: i32) -> (i32, i32) {
    %c0_i32 = arith.constant 0 : i32
    %c0_i32_0 = arith.constant 0 : i32
    return %arg0, %c0_i32 : i32, i32
  }
  func.func @transform_1(%arg0: i32) -> (i32, i32) {
    %c0_i32 = arith.constant 0 : i32
    %c0_i32_0 = arith.constant 0 : i32
    %c0_i32_1 = arith.constant 0 : i32
    return %c0_i32, %c0_i32_0 : i32, i32
  }
  func.func @transform_2(%arg0: i32) -> (i32, i32) {
    %c0_i32 = arith.constant 0 : i32
    %c0_i32_0 = arith.constant 0 : i32
    %c0_i32_1 = arith.constant 0 : i32
    return %c0_i32, %c0_i32_0 : i32, i32
  }
  func.func @transform_3(%arg0: i32) -> (i32, i32) {
    %c0_i32 = arith.constant 0 : i32
    %c0_i32_0 = arith.constant 0 : i32
    %c0_i32_1 = arith.constant 0 : i32
    return %c0_i32, %c0_i32_0 : i32, i32
  }
  func.func @transform_4(%arg0: i32) -> (i32, i32) {
    %c0_i32 = arith.constant 0 : i32
    %c0_i32_0 = arith.constant 0 : i32
    %c0_i32_1 = arith.constant 0 : i32
    return %c0_i32, %c0_i32_0 : i32, i32
  }
  func.func @transform_5(%arg0: i32) -> (i32, i32) {
    %c0_i32 = arith.constant 0 : i32
    %c0_i32_0 = arith.constant 0 : i32
    return %arg0, %c0_i32 : i32, i32
  }
}

</mosaic_0001>

<llo_original>
// kernel: tpu_custom_call.1
$region0: #{tpu_custom_call.1}
  #allocation0 [shape = 'u32[]', space=smem, size = 0x4, offset = 0x4, fixed_abs, tag = 'smem constant byte address 0x4 - core index']
  #allocation1 [shape = 'u32[144,128]{1,0:T(1,128)}', space=vmem, size = 0x12000, scoped, tag = 'internal scratch']
  %s0 = inlined_call_operand.vmem [shape: bf16[512,24], index: 0, kind: input, shape index: {}]
  %s1 = inlined_call_operand.vmem [shape: bf16[24,128], index: 1, kind: input, shape index: {}]
  %s2 = inlined_call_operand.vmem [shape: f32[1,128], index: 2, kind: input, shape index: {}]
  %s3 = inlined_call_operand.vmem [shape: bf16[128,256], index: 3, kind: input, shape index: {}]
  %s4 = inlined_call_operand.vmem [shape: f32[1,256], index: 4, kind: input, shape index: {}]
  %s5 = inlined_call_operand.hbm [shape: bf16[512,256], index: 5, kind: output, shape index: {}]
  %s6 = sld [smem:[#allocation0]]
  $region53: #{tpu_custom_call.1} parent=0
    _
  %s8 = ssub.s32 1, %s6
  %s9 = scalar_select 0, %s8, %s6
  $region1: #{tpu_custom_call.1} parent=0
    #allocation2 [shape = 'u8[262144]{0}', space=vmem, size = 0x40000, scoped, tag = 'output window, operand 0']
    #allocation3 [shape = 's32[2]{0}', space=sflag, size = 0x8, scoped, tag = 'scoped memory for tpu_custom_call.1']
    %10 = vsyncpa [#allocation3], 0
    %s11 = scalar_lea.sflag [#allocation3], 1
    %12 = vsyncpa %s11, 0
    loop: start=0, step=1, limit=4
    $region2: #{tpu_custom_call.1} parent=1 // loop_pre_header
      _
    $region3: #{tpu_custom_call.1} parent=1 // loop_header
      %s14 = sphi 0, %s18
      %p15 = scmp.ge.s32.totalorder %s14, 4
      %s24 = sphi 0, %s26
      %s27 = sphi 0, %s24
      %s28 = sphi 0, %s27
      %s44 = sphi 0, %s28
      %s48 = sphi 0, %s48
      %s50 = sphi 0, %s48
      %s51 = sphi 0, %s50
      %s65 = sphi 0, %s51
      %s69 = sphi 0, %s69
      %s71 = sphi 0, %s69
      %s72 = sphi 0, %s71
      %s86 = sphi 0, %s72
      %s90 = sphi 0, %s90
      %s92 = sphi 0, %s90
      %s93 = sphi 0, %s92
      %s107 = sphi 0, %s93
      %s111 = sphi 0, %s111
      %s113 = sphi 0, %s111
      %s114 = sphi 0, %s113
      %s128 = sphi 0, %s114
      %s134 = sphi 0, %s136
      %s137 = sphi 0, %s134
      %s138 = sphi 0, %s137
      %s154 = sphi 0, %s138
    $region4: #{tpu_custom_call.1} parent=1 // loop_header_branch
      %17 = sbr.rel (%p15) target = $region8
    $region5: #{tpu_custom_call.1} parent=1 // loop_body
      %s19 = ssub.s32 %s14, 1
      %s20 = ssub.s32 %s14, 2
      %s21 = sadd.s32 %s14, 1
      %s22 = ssub.s32 %s14, %s21
      %p23 = scmp.eq.s32.totalorder %s22, 0
      %s25 = sadd.s32 %s24, 1
      %s26 = scalar_select %p23, %s24, %s25
      %p29 = pneg %p23
      %p30 = scmp.eq.s32.totalorder %s14, 1
      %p31 = por %p29, %p30
      %p32 = scmp.ne.s32.totalorder %s24, %s27
      %p33 = scmp.eq.s32.totalorder %s14, 0
      %p34 = por %p32, %p33
      %p35 = scmp.ne.s32.totalorder %s24, %s27
      %p36 = scmp.eq.s32.totalorder %s19, 1
      %p37 = por %p35, %p36
      %p38 = scmp.ne.s32.totalorder %s27, %s28
      %p39 = scmp.eq.s32.totalorder %s19, 0
      %p40 = por %p38, %p39
      %p41 = scmp.ne.s32.totalorder %s27, %s28
      %p42 = scmp.eq.s32.totalorder %s20, 1
      %p43 = por %p41, %p42
      %p45 = scmp.ne.s32.totalorder %s28, %s44
      %p46 = scmp.eq.s32.totalorder %s20, 0
      %p47 = por %p45, %p46
      %s49 = sadd.s32 %s48, 1
      %p52 = scmp.eq.s32.totalorder %s14, 1
      %p53 = scmp.ne.s32.totalorder %s48, %s50
      %p54 = scmp.eq.s32.totalorder %s14, 0
      %p55 = por %p53, %p54
      %p56 = scmp.ne.s32.totalorder %s48, %s50
      %p57 = scmp.eq.s32.totalorder %s19, 1
      %p58 = por %p56, %p57
      %p59 = scmp.ne.s32.totalorder %s50, %s51
      %p60 = scmp.eq.s32.totalorder %s19, 0
      %p61 = por %p59, %p60
      %p62 = scmp.ne.s32.totalorder %s50, %s51
      %p63 = scmp.eq.s32.totalorder %s20, 1
      %p64 = por %p62, %p63
      %p66 = scmp.ne.s32.totalorder %s51, %s65
      %p67 = scmp.eq.s32.totalorder %s20, 0
      %p68 = por %p66, %p67
      %s70 = sadd.s32 %s69, 1
      %p73 = scmp.eq.s32.totalorder %s14, 1
      %p74 = scmp.ne.s32.totalorder %s69, %s71
      %p75 = scmp.eq.s32.totalorder %s14, 0
      %p76 = por %p74, %p75
      %p77 = scmp.ne.s32.totalorder %s69, %s71
      %p78 = scmp.eq.s32.totalorder %s19, 1
      %p79 = por %p77, %p78
      %p80 = scmp.ne.s32.totalorder %s71, %s72
      %p81 = scmp.eq.s32.totalorder %s19, 0
      %p82 = por %p80, %p81
      %p83 = scmp.ne.s32.totalorder %s71, %s72
      %p84 = scmp.eq.s32.totalorder %s20, 1
      %p85 = por %p83, %p84
      %p87 = scmp.ne.s32.totalorder %s72, %s86
      %p88 = scmp.eq.s32.totalorder %s20, 0
      %p89 = por %p87, %p88
      %s91 = sadd.s32 %s90, 1
      %p94 = scmp.eq.s32.totalorder %s14, 1
      %p95 = scmp.ne.s32.totalorder %s90, %s92
      %p96 = scmp.eq.s32.totalorder %s14, 0
      %p97 = por %p95, %p96
      %p98 = scmp.ne.s32.totalorder %s90, %s92
      %p99 = scmp.eq.s32.totalorder %s19, 1
      %p100 = por %p98, %p99
      %p101 = scmp.ne.s32.totalorder %s92, %s93
      %p102 = scmp.eq.s32.totalorder %s19, 0
      %p103 = por %p101, %p102
      %p104 = scmp.ne.s32.totalorder %s92, %s93
      %p105 = scmp.eq.s32.totalorder %s20, 1
      %p106 = por %p104, %p105
      %p108 = scmp.ne.s32.totalorder %s93, %s107
      %p109 = scmp.eq.s32.totalorder %s20, 0
      %p110 = por %p108, %p109
      %s112 = sadd.s32 %s111, 1
      %p115 = scmp.eq.s32.totalorder %s14, 1
      %p116 = scmp.ne.s32.totalorder %s111, %s113
      %p117 = scmp.eq.s32.totalorder %s14, 0
      %p118 = por %p116, %p117
      %p119 = scmp.ne.s32.totalorder %s111, %s113
      %p120 = scmp.eq.s32.totalorder %s19, 1
      %p121 = por %p119, %p120
      %p122 = scmp.ne.s32.totalorder %s113, %s114
      %p123 = scmp.eq.s32.totalorder %s19, 0
      %p124 = por %p122, %p123
      %p125 = scmp.ne.s32.totalorder %s113, %s114
      %p126 = scmp.eq.s32.totalorder %s20, 1
      %p127 = por %p125, %p126
      %p129 = scmp.ne.s32.totalorder %s114, %s128
      %p130 = scmp.eq.s32.totalorder %s20, 0
      %p131 = por %p129, %p130
      %s132 = ssub.s32 %s14, %s21
      %p133 = scmp.eq.s32.totalorder %s132, 0
      %s135 = sadd.s32 %s134, 1
      %s136 = scalar_select %p133, %s134, %s135
      %p139 = pneg %p133
      %p140 = scmp.eq.s32.totalorder %s14, 1
      %p141 = por %p139, %p140
      %p142 = scmp.ne.s32.totalorder %s134, %s137
      %p143 = scmp.eq.s32.totalorder %s14, 0
      %p144 = por %p142, %p143
      %p145 = scmp.ne.s32.totalorder %s134, %s137
      %p146 = scmp.eq.s32.totalorder %s19, 1
      %p147 = por %p145, %p146
      %p148 = scmp.ne.s32.totalorder %s137, %s138
      %p149 = scmp.eq.s32.totalorder %s19, 0
      %p150 = por %p148, %p149
      %p151 = scmp.ne.s32.totalorder %s137, %s138
      %p152 = scmp.eq.s32.totalorder %s20, 1
      %p153 = por %p151, %p152
      %p155 = scmp.ne.s32.totalorder %s138, %s154
      %p156 = scmp.eq.s32.totalorder %s20, 0
      %p157 = por %p155, %p156
      %p158 = scmp.le.s32.totalorder 1, %s14
      %p159 = scmp.lt.s32.totalorder %s14, 3
      %p160 = pnand %p158, %p159
      %p161 = pneg %p160
      // Predicated region
      $region9: #{tpu_custom_call.1} parent=5 // pred_check
        _
      $region10: #{tpu_custom_call.1} parent=5 // pred_check_branch
        %163 = sbr.rel (%p160) target = $region12
      $region11: #{tpu_custom_call.1} parent=5 // pred_region
        %s164 = ssub.s32 %s14, 1
        // Predicated region
        $region13: #{tpu_custom_call.1} parent=11 // pred_check
          %p165 = pneg %p61
        $region14: #{tpu_custom_call.1} parent=11 // pred_check_branch
          %167 = sbr.rel (%p165) target = $region16
        $region15: #{tpu_custom_call.1} parent=11 // pred_region
          _
        $region16: #{tpu_custom_call.1} parent=11 // pred_fallthru
          _
        // Predicated region
        $region17: #{tpu_custom_call.1} parent=11 // pred_check
          %p168 = pneg %p82
        $region18: #{tpu_custom_call.1} parent=11 // pred_check_branch
          %170 = sbr.rel (%p168) target = $region20
        $region19: #{tpu_custom_call.1} parent=11 // pred_region
          _
        $region20: #{tpu_custom_call.1} parent=11 // pred_fallthru
          _
        // Predicated region
        $region21: #{tpu_custom_call.1} parent=11 // pred_check
          %p171 = pneg %p103
        $region22: #{tpu_custom_call.1} parent=11 // pred_check_branch
          %173 = sbr.rel (%p171) target = $region24
        $region23: #{tpu_custom_call.1} parent=11 // pred_region
          _
        $region24: #{tpu_custom_call.1} parent=11 // pred_fallthru
          _
        // Predicated region
        $region25: #{tpu_custom_call.1} parent=11 // pred_check
          %p174 = pneg %p124
        $region26: #{tpu_custom_call.1} parent=11 // pred_check_branch
          %176 = sbr.rel (%p174) target = $region28
        $region27: #{tpu_custom_call.1} parent=11 // pred_region
          _
        $region28: #{tpu_custom_call.1} parent=11 // pred_fallthru
          _
      $region12: #{tpu_custom_call.1} parent=5 // pred_fallthru
        _
      %p177 = scmp.lt.s32.totalorder %s14, 2
      // Predicated region
      $region29: #{tpu_custom_call.1} parent=5 // pred_check
        %p178 = pneg %p177
      $region30: #{tpu_custom_call.1} parent=5 // pred_check_branch
        %180 = sbr.rel (%p178) target = $region32
      $region31: #{tpu_custom_call.1} parent=5 // pred_region
        // Predicated region
        $region33: #{tpu_custom_call.1} parent=31 // pred_check
          %p181 = pneg %p34
        $region34: #{tpu_custom_call.1} parent=31 // pred_check_branch
          %183 = sbr.rel (%p181) target = $region36
        $region35: #{tpu_custom_call.1} parent=31 // pred_region
          %s184 = smul.u32 32, %s14
          %p185 = scmp.lt.s32.totalorder %s184, 63
          %s186 = scalar_select %p185, %s184, 63
          %s187 = smul.addr %s186, 4
          %s188 = scalar_lea.vmem %s0, %s187
          %s189 = smul.u32 32, %s14
        $region36: #{tpu_custom_call.1} parent=31 // pred_fallthru
          _
      $region32: #{tpu_custom_call.1} parent=5 // pred_fallthru
        _
      %p190 = scmp.le.s32.totalorder 1, %s14
      %p191 = scmp.lt.s32.totalorder %s14, 3
      %p192 = pnand %p190, %p191
      %p193 = pneg %p192
      // Predicated region
      $region37: #{tpu_custom_call.1} parent=5 // pred_check
        _
      $region38: #{tpu_custom_call.1} parent=5 // pred_check_branch
        %195 = sbr.rel (%p192) target = $region40
      $region39: #{tpu_custom_call.1} parent=5 // pred_region
        %s196 = ssub.s32 %s14, 1
        %s197 = smul.u32 32, %s19
        %p198 = scmp.lt.s32.totalorder %s197, 63
        %s199 = scalar_select %p198, %s197, 63
        %s200 = smul.addr %s199, 4
        %s201 = scalar_lea.vmem %s0, %s200
        %p202 = pneg %p40
        %p203 = pneg %p37
        %p204 = pneg %p61
        %p205 = pneg %p58
        %p206 = pneg %p82
        %p207 = pneg %p79
        %p208 = pneg %p103
        %p209 = pneg %p100
        %p210 = pneg %p124
        %p211 = pneg %p121
        %p212 = pneg %p150
        %p213 = pneg %p147
        %s214 = sand.u32 %s137, 1
        %s215 = scalar_lea.sflag [#allocation3], %s214
        %s216 = sand.u32 %s137, 1
        %s217 = smul.addr %s216, 256
        %s218 = scalar_lea.vmem [#allocation2], %s217
        %s219 = smul.u32 32, %s19
        %p220 = scmp.lt.s32.totalorder %s219, 63
        %s221 = scalar_select %p220, %s219, 63
        %s222 = smul.addr %s221, 4
        %s223 = scalar_lea.vmem %s0, %s222
        %s224 = smul.u32 32, %s19
        %s225 = smul.u32 32, %s19
        %v227 = vld [vmem:[%s223] sm:$0xf]
        %v228 = vld [vmem:[%s223 + $0x4] sm:$0xf]
        %v229 = vld [vmem:[%s223 + $0x8] sm:$0xf]
        %v230 = vld [vmem:[%s223 + $0xc] sm:$0xf]
        %v231 = vld [vmem:[%s223 + $0x10] sm:$0xf]
        %v232 = vld [vmem:[%s223 + $0x14] sm:$0xf]
        %v233 = vld [vmem:[%s223 + $0x18] sm:$0xf]
        %v234 = vld [vmem:[%s223 + $0x1c] sm:$0xf]
        %v235 = vld [vmem:[%s223 + $0x20] sm:$0xf]
        %v236 = vld [vmem:[%s223 + $0x24] sm:$0xf]
        %v237 = vld [vmem:[%s223 + $0x28] sm:$0xf]
        %v238 = vld [vmem:[%s223 + $0x2c] sm:$0xf]
        %v239 = vld [vmem:[%s223 + $0x30] sm:$0xf]
        %v240 = vld [vmem:[%s223 + $0x34] sm:$0xf]
        %v241 = vld [vmem:[%s223 + $0x38] sm:$0xf]
        %v242 = vld [vmem:[%s223 + $0x3c] sm:$0xf]
        %v243 = vld [vmem:[%s223 + $0x40] sm:$0xf]
        %v244 = vld [vmem:[%s223 + $0x44] sm:$0xf]
        %v245 = vld [vmem:[%s223 + $0x48] sm:$0xf]
        %v246 = vld [vmem:[%s223 + $0x4c] sm:$0xf]
        %v247 = vld [vmem:[%s223 + $0x50] sm:$0xf]
        %v248 = vld [vmem:[%s223 + $0x54] sm:$0xf]
        %v249 = vld [vmem:[%s223 + $0x58] sm:$0xf]
        %v250 = vld [vmem:[%s223 + $0x5c] sm:$0xf]
        %v251 = vld [vmem:[%s223 + $0x60] sm:$0xf]
        %v252 = vld [vmem:[%s223 + $0x64] sm:$0xf]
        %v253 = vld [vmem:[%s223 + $0x68] sm:$0xf]
        %v254 = vld [vmem:[%s223 + $0x6c] sm:$0xf]
        %v255 = vld [vmem:[%s223 + $0x70] sm:$0xf]
        %v256 = vld [vmem:[%s223 + $0x74] sm:$0xf]
        %v257 = vld [vmem:[%s223 + $0x78] sm:$0xf]
        %v258 = vld [vmem:[%s223 + $0x7c] sm:$0xf]
        %v259 = vld [vmem:[%s1] sm:$0xf]
        %v260 = vld [vmem:[%s1 + $0x4] sm:$0xf]
        %v261 = vld [vmem:[%s1 + $0x8] sm:$0xf]
        %v262 = vld [vmem:[%s2] sm:$0x1]
        %v264 = vlaneseq
        %v265 = vshrl.u32 %v264, 7
        %v266 = vsub.s32 0, %v265
        %v267 = vrot.slane %v262, %v266
        %v301 = vunpack.c.l.b16 %v227
        %v302 = vunpack.c.l.b16 %v228
        %v303 = vunpack.c.l.b16 %v229
        %v304 = vunpack.c.l.b16 %v230
        %v305 = vunpack.c.l.b16 %v231
        %v306 = vunpack.c.l.b16 %v232
        %v307 = vunpack.c.l.b16 %v233
        %v308 = vunpack.c.l.b16 %v234
        %v309 = vunpack.c.l.b16 %v235
        %v310 = vunpack.c.l.b16 %v236
        %v311 = vunpack.c.l.b16 %v237
        %v312 = vunpack.c.l.b16 %v238
        %v313 = vunpack.c.l.b16 %v239
        %v314 = vunpack.c.l.b16 %v240
        %v315 = vunpack.c.l.b16 %v241
        %v316 = vunpack.c.l.b16 %v242
        %v317 = vunpack.c.l.b16 %v243
        %v318 = vunpack.c.l.b16 %v244
        %v319 = vunpack.c.l.b16 %v245
        %v320 = vunpack.c.l.b16 %v246
        %v321 = vunpack.c.l.b16 %v247
        %v322 = vunpack.c.l.b16 %v248
        %v323 = vunpack.c.l.b16 %v249
        %v324 = vunpack.c.l.b16 %v250
        %v325 = vunpack.c.l.b16 %v251
        %v326 = vunpack.c.l.b16 %v252
        %v327 = vunpack.c.l.b16 %v253
        %v328 = vunpack.c.l.b16 %v254
        %v329 = vunpack.c.l.b16 %v255
        %v330 = vunpack.c.l.b16 %v256
        %v331 = vunpack.c.l.b16 %v257
        %v332 = vunpack.c.l.b16 %v258
        %v333 = vpack.c.b16 %v302, %v301
        %v334 = vpack.c.b16 %v304, %v303
        %v335 = vpack.c.b16 %v306, %v305
        %v336 = vpack.c.b16 %v308, %v307
        %v337 = vpack.c.b16 %v310, %v309
        %v338 = vpack.c.b16 %v312, %v311
        %v339 = vpack.c.b16 %v314, %v313
        %v340 = vpack.c.b16 %v316, %v315
        %v341 = vpack.c.b16 %v318, %v317
        %v342 = vpack.c.b16 %v320, %v319
        %v343 = vpack.c.b16 %v322, %v321
        %v344 = vpack.c.b16 %v324, %v323
        %v345 = vpack.c.b16 %v326, %v325
        %v346 = vpack.c.b16 %v328, %v327
        %v347 = vpack.c.b16 %v330, %v329
        %v348 = vpack.c.b16 %v332, %v331
        %v352 = vunpack.c.l.b16 %v259
        %v353 = vunpack.c.l.b16 %v260
        %v354 = vunpack.c.l.b16 %v261
        %v355 = vpack.c.b16 %v353, %v352
        %v356 = vpack.c.b16 %v354, %v354
        %vm358 = vcmask 195584
        %v360 = vsel %vm358, %v333, 0
        %v363 = vsel %vm358, %v334, 0
        %v366 = vsel %vm358, %v335, 0
        %v369 = vsel %vm358, %v336, 0
        %v372 = vsel %vm358, %v337, 0
        %v375 = vsel %vm358, %v338, 0
        %v378 = vsel %vm358, %v339, 0
        %v381 = vsel %vm358, %v340, 0
        %v384 = vsel %vm358, %v341, 0
        %v387 = vsel %vm358, %v342, 0
        %v390 = vsel %vm358, %v343, 0
        %v393 = vsel %vm358, %v344, 0
        %v396 = vsel %vm358, %v345, 0
        %v399 = vsel %vm358, %v346, 0
        %v402 = vsel %vm358, %v347, 0
        %v405 = vsel %vm358, %v348, 0
        %vm407 = vcmask 1043456
        %v409 = vsel %vm407, %v356, 0
        %411 = vmatprep.subr.bf16.mxu0 0
        %412 = vmatpush1.bf16.msra.mxu0 %v355
        %413 = vmatprep.subr.bf16.mxu0 0
        %414 = vmatpush1.bf16.msra.mxu0 %v409
        %415 = vmatprep.subr.bf16.mxu0 0
        %416 = vmatpush1.bf16.msra.mxu0 0
        %417 = vmatprep.subr.bf16.mxu0 0
        %418 = vmatpush1.bf16.msra.mxu0 0
        %419 = vmatprep.subr.bf16.mxu0 0
        %420 = vmatpush1.bf16.msra.mxu0 0
        %421 = vmatprep.subr.bf16.mxu0 0
        %422 = vmatpush1.bf16.msra.mxu0 0
        %423 = vmatprep.subr.bf16.mxu0 0
        %424 = vmatpush1.bf16.msra.mxu0 0
        %425 = vmatprep.subr.bf16.mxu0 0
        %426 = vmatpush1.bf16.msra.mxu0 0
        %427 = vmatprep.subr.bf16.mxu0 0
        %428 = vmatpush1.bf16.msra.mxu0 0
        %429 = vmatprep.subr.bf16.mxu0 0
        %430 = vmatpush1.bf16.msra.mxu0 0
        %431 = vmatprep.subr.bf16.mxu0 0
        %432 = vmatpush1.bf16.msra.mxu0 0
        %433 = vmatprep.subr.bf16.mxu0 0
        %434 = vmatpush1.bf16.msra.mxu0 0
        %435 = vmatprep.subr.bf16.mxu0 0
        %436 = vmatpush1.bf16.msra.mxu0 0
        %437 = vmatprep.subr.bf16.mxu0 0
        %438 = vmatpush1.bf16.msra.mxu0 0
        %439 = vmatprep.subr.bf16.mxu0 0
        %440 = vmatpush1.bf16.msra.mxu0 0
        %441 = vmatprep.subr.bf16.mxu0 0
        %442 = vmatpush1.bf16.msra.mxu0 0
        %443 = vmatprep.mubr.bf16.mxu0 0
        %444 = vmatmul.mubr.bf16.gmra.mrb[0].mxu0 %v360
        %v445 = vpop.f32.mrb[0].mxu0
        %v446 = vadd.f32 %v267, %v445
        %v447 = vpop.f32.mrb[0].mxu0
        %v448 = vpop.f32.mrb[0].mxu0
        %v449 = vadd.f32 %v267, %v448
        %v450 = vpop.f32.mrb[0].mxu0
        %451 = vmatprep.mubr.bf16.mxu0 0
        %452 = vmatmul.mubr.bf16.gmra.mrb[0].mxu0 %v363
        %v453 = vpop.f32.mrb[0].mxu0
        %v454 = vadd.f32 %v267, %v453
        %v455 = vpop.f32.mrb[0].mxu0
        %v456 = vpop.f32.mrb[0].mxu0
        %v457 = vadd.f32 %v267, %v456
        %v458 = vpop.f32.mrb[0].mxu0
        %459 = vmatprep.mubr.bf16.mxu0 0
        %460 = vmatmul.mubr.bf16.gmra.mrb[0].mxu0 %v366
        %v461 = vpop.f32.mrb[0].mxu0
        %v462 = vadd.f32 %v267, %v461
        %v463 = vpop.f32.mrb[0].mxu0
        %v464 = vpop.f32.mrb[0].mxu0
        %v465 = vadd.f32 %v267, %v464
        %v466 = vpop.f32.mrb[0].mxu0
        %467 = vmatprep.mubr.bf16.mxu0 0
        %468 = vmatmul.mubr.bf16.gmra.mrb[0].mxu0 %v369
        %v469 = vpop.f32.mrb[0].mxu0
        %v470 = vadd.f32 %v267, %v469
        %v471 = vpop.f32.mrb[0].mxu0
        %v472 = vpop.f32.mrb[0].mxu0
        %v473 = vadd.f32 %v267, %v472
        %v474 = vpop.f32.mrb[0].mxu0
        %475 = vmatprep.mubr.bf16.mxu0 0
        %476 = vmatmul.mubr.bf16.gmra.mrb[0].mxu0 %v372
        %v477 = vpop.f32.mrb[0].mxu0
        %v478 = vadd.f32 %v267, %v477
        %v479 = vpop.f32.mrb[0].mxu0
        %v480 = vpop.f32.mrb[0].mxu0
        %v481 = vadd.f32 %v267, %v480
        %v482 = vpop.f32.mrb[0].mxu0
        %483 = vmatprep.mubr.bf16.mxu0 0
        %484 = vmatmul.mubr.bf16.gmra.mrb[0].mxu0 %v375
        %v485 = vpop.f32.mrb[0].mxu0
        %v486 = vadd.f32 %v267, %v485
        %v487 = vpop.f32.mrb[0].mxu0
        %v488 = vpop.f32.mrb[0].mxu0
        %v489 = vadd.f32 %v267, %v488
        %v490 = vpop.f32.mrb[0].mxu0
        %491 = vmatprep.mubr.bf16.mxu0 0
        %492 = vmatmul.mubr.bf16.gmra.mrb[0].mxu0 %v378
        %v493 = vpop.f32.mrb[0].mxu0
        %v494 = vadd.f32 %v267, %v493
        %v495 = vpop.f32.mrb[0].mxu0
        %v496 = vpop.f32.mrb[0].mxu0
        %v497 = vadd.f32 %v267, %v496
        %v498 = vpop.f32.mrb[0].mxu0
        %499 = vmatprep.mubr.bf16.mxu0 0
        %500 = vmatmul.mubr.bf16.gmra.mrb[0].mxu0 %v381
        %v501 = vpop.f32.mrb[0].mxu0
        %v502 = vadd.f32 %v267, %v501
        %v503 = vpop.f32.mrb[0].mxu0
        %v504 = vpop.f32.mrb[0].mxu0
        %v505 = vadd.f32 %v267, %v504
        %v506 = vpop.f32.mrb[0].mxu0
        %507 = vmatprep.mubr.bf16.mxu0 0
        %508 = vmatmul.mubr.bf16.gmra.mrb[0].mxu0 %v384
        %v509 = vpop.f32.mrb[0].mxu0
        %v510 = vadd.f32 %v267, %v509
        %v511 = vpop.f32.mrb[0].mxu0
        %v512 = vpop.f32.mrb[0].mxu0
        %v513 = vadd.f32 %v267, %v512
        %v514 = vpop.f32.mrb[0].mxu0
        %515 = vmatprep.mubr.bf16.mxu0 0
        %516 = vmatmul.mubr.bf16.gmra.mrb[0].mxu0 %v387
        %v517 = vpop.f32.mrb[0].mxu0
        %v518 = vadd.f32 %v267, %v517
        %v519 = vpop.f32.mrb[0].mxu0
        %v520 = vpop.f32.mrb[0].mxu0
        %v521 = vadd.f32 %v267, %v520
        %v522 = vpop.f32.mrb[0].mxu0
        %523 = vmatprep.mubr.bf16.mxu0 0
        %524 = vmatmul.mubr.bf16.gmra.mrb[0].mxu0 %v390
        %v525 = vpop.f32.mrb[0].mxu0
        %v526 = vadd.f32 %v267, %v525
        %v527 = vpop.f32.mrb[0].mxu0
        %v528 = vpop.f32.mrb[0].mxu0
        %v529 = vadd.f32 %v267, %v528
        %v530 = vpop.f32.mrb[0].mxu0
        %531 = vmatprep.mubr.bf16.mxu0 0
        %532 = vmatmul.mubr.bf16.gmra.mrb[0].mxu0 %v393
        %v533 = vpop.f32.mrb[0].mxu0
        %v534 = vadd.f32 %v267, %v533
        %v535 = vpop.f32.mrb[0].mxu0
        %v536 = vpop.f32.mrb[0].mxu0
        %v537 = vadd.f32 %v267, %v536
        %v538 = vpop.f32.mrb[0].mxu0
        %539 = vmatprep.mubr.bf16.mxu0 0
        %540 = vmatmul.mubr.bf16.gmra.mrb[0].mxu0 %v396
        %v541 = vpop.f32.mrb[0].mxu0
        %v542 = vadd.f32 %v267, %v541
        %v543 = vpop.f32.mrb[0].mxu0
        %v544 = vpop.f32.mrb[0].mxu0
        %v545 = vadd.f32 %v267, %v544
        %v546 = vpop.f32.mrb[0].mxu0
        %547 = vmatprep.mubr.bf16.mxu0 0
        %548 = vmatmul.mubr.bf16.gmra.mrb[0].mxu0 %v399
        %v549 = vpop.f32.mrb[0].mxu0
        %v550 = vadd.f32 %v267, %v549
        %v551 = vpop.f32.mrb[0].mxu0
        %v552 = vpop.f32.mrb[0].mxu0
        %v553 = vadd.f32 %v267, %v552
        %v554 = vpop.f32.mrb[0].mxu0
        %555 = vmatprep.mubr.bf16.mxu0 0
        %556 = vmatmul.mubr.bf16.gmra.mrb[0].mxu0 %v402
        %v557 = vpop.f32.mrb[0].mxu0
        %v558 = vadd.f32 %v267, %v557
        %v559 = vpop.f32.mrb[0].mxu0
        %v560 = vpop.f32.mrb[0].mxu0
        %v561 = vadd.f32 %v267, %v560
        %v562 = vpop.f32.mrb[0].mxu0
        %563 = vmatprep.mubr.bf16.mxu0 0
        %564 = vmatmul.mubr.bf16.gmra.mrb[0].mxu0 %v405
        %v565 = vpop.f32.mrb[0].mxu0
        %v566 = vadd.f32 %v267, %v565
        %v567 = vpop.f32.mrb[0].mxu0
        %v568 = vpop.f32.mrb[0].mxu0
        %v569 = vadd.f32 %v267, %v568
        %v570 = vpop.f32.mrb[0].mxu0
        %571 = vdwg.mxu0
        %v572 = vmax.f32 %v446, 0.0
        %v573 = vmax.f32 %v449, 0.0
        %v574 = vmax.f32 %v454, 0.0
        %v575 = vmax.f32 %v457, 0.0
        %v576 = vmax.f32 %v462, 0.0
        %v577 = vmax.f32 %v465, 0.0
        %v578 = vmax.f32 %v470, 0.0
        %v579 = vmax.f32 %v473, 0.0
        %v580 = vmax.f32 %v478, 0.0
        %v581 = vmax.f32 %v481, 0.0
        %v582 = vmax.f32 %v486, 0.0
        %v583 = vmax.f32 %v489, 0.0
        %v584 = vmax.f32 %v494, 0.0
        %v585 = vmax.f32 %v497, 0.0
        %v586 = vmax.f32 %v502, 0.0
        %v587 = vmax.f32 %v505, 0.0
        %v588 = vmax.f32 %v510, 0.0
        %v589 = vmax.f32 %v513, 0.0
        %v590 = vmax.f32 %v518, 0.0
        %v591 = vmax.f32 %v521, 0.0
        %v592 = vmax.f32 %v526, 0.0
        %v593 = vmax.f32 %v529, 0.0
        %v594 = vmax.f32 %v534, 0.0
        %v595 = vmax.f32 %v537, 0.0
        %v596 = vmax.f32 %v542, 0.0
        %v597 = vmax.f32 %v545, 0.0
        %v598 = vmax.f32 %v550, 0.0
        %v599 = vmax.f32 %v553, 0.0
        %v600 = vmax.f32 %v558, 0.0
        %v601 = vmax.f32 %v561, 0.0
        %v602 = vmax.f32 %v566, 0.0
        %v603 = vmax.f32 %v569, 0.0
        %v604 = vpack.c.bf16 %v573, %v572
        %v605 = vpack.c.bf16 %v575, %v574
        %v606 = vpack.c.bf16 %v577, %v576
        %v607 = vpack.c.bf16 %v579, %v578
        %v608 = vpack.c.bf16 %v581, %v580
        %v609 = vpack.c.bf16 %v583, %v582
        %v610 = vpack.c.bf16 %v585, %v584
        %v611 = vpack.c.bf16 %v587, %v586
        %v612 = vpack.c.bf16 %v589, %v588
        %v613 = vpack.c.bf16 %v591, %v590
        %v614 = vpack.c.bf16 %v593, %v592
        %v615 = vpack.c.bf16 %v595, %v594
        %v616 = vpack.c.bf16 %v597, %v596
        %v617 = vpack.c.bf16 %v599, %v598
        %v618 = vpack.c.bf16 %v601, %v600
        %v619 = vpack.c.bf16 %v603, %v602
        %v620 = vld [vmem:[%s3] sm:$0xff]
        %v621 = vld [vmem:[%s3 + $0x8] sm:$0xff]
        %v622 = vld [vmem:[%s3 + $0x10] sm:$0xff]
        %v623 = vld [vmem:[%s3 + $0x18] sm:$0xff]
        %v624 = vld [vmem:[%s3 + $0x20] sm:$0xff]
        %v625 = vld [vmem:[%s3 + $0x28] sm:$0xff]
        %v626 = vld [vmem:[%s3 + $0x30] sm:$0xff]
        %v627 = vld [vmem:[%s3 + $0x38] sm:$0xff]
        %v628 = vld [vmem:[%s3 + $0x40] sm:$0xff]
        %v629 = vld [vmem:[%s3 + $0x48] sm:$0xff]
        %v630 = vld [vmem:[%s3 + $0x50] sm:$0xff]
        %v631 = vld [vmem:[%s3 + $0x58] sm:$0xff]
        %v632 = vld [vmem:[%s3 + $0x60] sm:$0xff]
        %v633 = vld [vmem:[%s3 + $0x68] sm:$0xff]
        %v634 = vld [vmem:[%s3 + $0x70] sm:$0xff]
        %v635 = vld [vmem:[%s3 + $0x78] sm:$0xff]
        %v636 = vld [vmem:[%s4] sm:$0x3]
        %v638 = vlaneseq
        %v639 = vshrl.u32 %v638, 7
        %v640 = vsub.s32 0, %v639
        %v641 = vrot.slane %v636, %v640
        %v642 = vlaneseq
        %v643 = vshrl.u32 %v642, 7
        %v644 = vsub.s32 1, %v643
        %v645 = vrot.slane %v636, %v644
        %v664 = vunpack.c.l.b16 %v620
        %v665 = vunpack.c.h.b16 %v620
        %v666 = vunpack.c.l.b16 %v621
        %v667 = vunpack.c.h.b16 %v621
        %v668 = vunpack.c.l.b16 %v622
        %v669 = vunpack.c.h.b16 %v622
        %v670 = vunpack.c.l.b16 %v623
        %v671 = vunpack.c.h.b16 %v623
        %v672 = vunpack.c.l.b16 %v624
        %v673 = vunpack.c.h.b16 %v624
        %v674 = vunpack.c.l.b16 %v625
        %v675 = vunpack.c.h.b16 %v625
        %v676 = vunpack.c.l.b16 %v626
        %v677 = vunpack.c.h.b16 %v626
        %v678 = vunpack.c.l.b16 %v627
        %v679 = vunpack.c.h.b16 %v627
        %v680 = vunpack.c.l.b16 %v628
        %v681 = vunpack.c.h.b16 %v628
        %v682 = vunpack.c.l.b16 %v629
        %v683 = vunpack.c.h.b16 %v629
        %v684 = vunpack.c.l.b16 %v630
        %v685 = vunpack.c.h.b16 %v630
        %v686 = vunpack.c.l.b16 %v631
        %v687 = vunpack.c.h.b16 %v631
        %v688 = vunpack.c.l.b16 %v632
        %v689 = vunpack.c.h.b16 %v632
        %v690 = vunpack.c.l.b16 %v633
        %v691 = vunpack.c.h.b16 %v633
        %v692 = vunpack.c.l.b16 %v634
        %v693 = vunpack.c.h.b16 %v634
        %v694 = vunpack.c.l.b16 %v635
        %v695 = vunpack.c.h.b16 %v635
        %v696 = vpack.c.b16 %v666, %v664
        %v697 = vpack.c.b16 %v667, %v665
        %v698 = vpack.c.b16 %v670, %v668
        %v699 = vpack.c.b16 %v671, %v669
        %v700 = vpack.c.b16 %v674, %v672
        %v701 = vpack.c.b16 %v675, %v673
        %v702 = vpack.c.b16 %v678, %v676
        %v703 = vpack.c.b16 %v679, %v677
        %v704 = vpack.c.b16 %v682, %v680
        %v705 = vpack.c.b16 %v683, %v681
        %v706 = vpack.c.b16 %v686, %v684
        %v707 = vpack.c.b16 %v687, %v685
        %v708 = vpack.c.b16 %v690, %v688
        %v709 = vpack.c.b16 %v691, %v689
        %v710 = vpack.c.b16 %v694, %v692
        %v711 = vpack.c.b16 %v695, %v693
        %728 = vmatprep.subr.bf16.mxu0 %v697
        %729 = vmatpush1.bf16.msra.mxu0 %v696
        %730 = vmatprep.subr.bf16.mxu0 %v699
        %731 = vmatpush1.bf16.msra.mxu0 %v698
        %732 = vmatprep.subr.bf16.mxu0 %v701
        %733 = vmatpush1.bf16.msra.mxu0 %v700
        %734 = vmatprep.subr.bf16.mxu0 %v703
        %735 = vmatpush1.bf16.msra.mxu0 %v702
        %736 = vmatprep.subr.bf16.mxu0 %v705
        %737 = vmatpush1.bf16.msra.mxu0 %v704
        %738 = vmatprep.subr.bf16.mxu0 %v707
        %739 = vmatpush1.bf16.msra.mxu0 %v706
        %740 = vmatprep.subr.bf16.mxu0 %v709
        %741 = vmatpush1.bf16.msra.mxu0 %v708
        %742 = vmatprep.subr.bf16.mxu0 %v711
        %743 = vmatpush1.bf16.msra.mxu0 %v710
        %744 = vmatprep.subr.bf16.mxu0 0
        %745 = vmatpush1.bf16.msra.mxu0 0
        %746 = vmatprep.subr.bf16.mxu0 0
        %747 = vmatpush1.bf16.msra.mxu0 0
        %748 = vmatprep.subr.bf16.mxu0 0
        %749 = vmatpush1.bf16.msra.mxu0 0
        %750 = vmatprep.subr.bf16.mxu0 0
        %751 = vmatpush1.bf16.msra.mxu0 0
        %752 = vmatprep.subr.bf16.mxu0 0
        %753 = vmatpush1.bf16.msra.mxu0 0
        %754 = vmatprep.subr.bf16.mxu0 0
        %755 = vmatpush1.bf16.msra.mxu0 0
        %756 = vmatprep.subr.bf16.mxu0 0
        %757 = vmatpush1.bf16.msra.mxu0 0
        %758 = vmatprep.subr.bf16.mxu0 0
        %759 = vmatpush1.bf16.msra.mxu0 0
        %760 = vmatprep.mubr.bf16.mxu0 0
        %761 = vmatmul.mubr.bf16.gmra.mrb[0].mxu0 %v604
        %v762 = vpop.f32.mrb[0].mxu0
        %v763 = vadd.f32 %v641, %v762
        %v764 = vpop.f32.mrb[0].mxu0
        %v765 = vadd.f32 %v645, %v764
        %v766 = vpop.f32.mrb[0].mxu0
        %v767 = vadd.f32 %v641, %v766
        %v768 = vpop.f32.mrb[0].mxu0
        %v769 = vadd.f32 %v645, %v768
        %770 = vmatprep.mubr.bf16.mxu0 0
        %771 = vmatmul.mubr.bf16.gmra.mrb[0].mxu0 %v605
        %v772 = vpop.f32.mrb[0].mxu0
        %v773 = vadd.f32 %v641, %v772
        %v774 = vpop.f32.mrb[0].mxu0
        %v775 = vadd.f32 %v645, %v774
        %v776 = vpop.f32.mrb[0].mxu0
        %v777 = vadd.f32 %v641, %v776
        %v778 = vpop.f32.mrb[0].mxu0
        %v779 = vadd.f32 %v645, %v778
        %780 = vmatprep.mubr.bf16.mxu0 0
        %781 = vmatmul.mubr.bf16.gmra.mrb[0].mxu0 %v606
        %v782 = vpop.f32.mrb[0].mxu0
        %v783 = vadd.f32 %v641, %v782
        %v784 = vpop.f32.mrb[0].mxu0
        %v785 = vadd.f32 %v645, %v784
        %v786 = vpop.f32.mrb[0].mxu0
        %v787 = vadd.f32 %v641, %v786
        %v788 = vpop.f32.mrb[0].mxu0
        %v789 = vadd.f32 %v645, %v788
        %790 = vmatprep.mubr.bf16.mxu0 0
        %791 = vmatmul.mubr.bf16.gmra.mrb[0].mxu0 %v607
        %v792 = vpop.f32.mrb[0].mxu0
        %v793 = vadd.f32 %v641, %v792
        %v794 = vpop.f32.mrb[0].mxu0
        %v795 = vadd.f32 %v645, %v794
        %v796 = vpop.f32.mrb[0].mxu0
        %v797 = vadd.f32 %v641, %v796
        %v798 = vpop.f32.mrb[0].mxu0
        %v799 = vadd.f32 %v645, %v798
        %800 = vmatprep.mubr.bf16.mxu0 0
        %801 = vmatmul.mubr.bf16.gmra.mrb[0].mxu0 %v608
        %v802 = vpop.f32.mrb[0].mxu0
        %v803 = vadd.f32 %v641, %v802
        %v804 = vpop.f32.mrb[0].mxu0
        %v805 = vadd.f32 %v645, %v804
        %v806 = vpop.f32.mrb[0].mxu0
        %v807 = vadd.f32 %v641, %v806
        %v808 = vpop.f32.mrb[0].mxu0
        %v809 = vadd.f32 %v645, %v808
        %810 = vmatprep.mubr.bf16.mxu0 0
        %811 = vmatmul.mubr.bf16.gmra.mrb[0].mxu0 %v609
        %v812 = vpop.f32.mrb[0].mxu0
        %v813 = vadd.f32 %v641, %v812
        %v814 = vpop.f32.mrb[0].mxu0
        %v815 = vadd.f32 %v645, %v814
        %v816 = vpop.f32.mrb[0].mxu0
        %v817 = vadd.f32 %v641, %v816
        %v818 = vpop.f32.mrb[0].mxu0
        %v819 = vadd.f32 %v645, %v818
        %820 = vmatprep.mubr.bf16.mxu0 0
        %821 = vmatmul.mubr.bf16.gmra.mrb[0].mxu0 %v610
        %v822 = vpop.f32.mrb[0].mxu0
        %v823 = vadd.f32 %v641, %v822
        %v824 = vpop.f32.mrb[0].mxu0
        %v825 = vadd.f32 %v645, %v824
        %v826 = vpop.f32.mrb[0].mxu0
        %v827 = vadd.f32 %v641, %v826
        %v828 = vpop.f32.mrb[0].mxu0
        %v829 = vadd.f32 %v645, %v828
        %830 = vmatprep.mubr.bf16.mxu0 0
        %831 = vmatmul.mubr.bf16.gmra.mrb[0].mxu0 %v611
        %v832 = vpop.f32.mrb[0].mxu0
        %v833 = vadd.f32 %v641, %v832
        %v834 = vpop.f32.mrb[0].mxu0
        %v835 = vadd.f32 %v645, %v834
        %v836 = vpop.f32.mrb[0].mxu0
        %v837 = vadd.f32 %v641, %v836
        %v838 = vpop.f32.mrb[0].mxu0
        %v839 = vadd.f32 %v645, %v838
        %840 = vmatprep.mubr.bf16.mxu0 0
        %841 = vmatmul.mubr.bf16.gmra.mrb[0].mxu0 %v612
        %v842 = vpop.f32.mrb[0].mxu0
        %v843 = vadd.f32 %v641, %v842
        %v844 = vpop.f32.mrb[0].mxu0
        %v845 = vadd.f32 %v645, %v844
        %v846 = vpop.f32.mrb[0].mxu0
        %v847 = vadd.f32 %v641, %v846
        %v848 = vpop.f32.mrb[0].mxu0
        %v849 = vadd.f32 %v645, %v848
        %850 = vmatprep.mubr.bf16.mxu0 0
        %851 = vmatmul.mubr.bf16.gmra.mrb[0].mxu0 %v613
        %v852 = vpop.f32.mrb[0].mxu0
        %v853 = vadd.f32 %v641, %v852
        %v854 = vpop.f32.mrb[0].mxu0
        %v855 = vadd.f32 %v645, %v854
        %v856 = vpop.f32.mrb[0].mxu0
        %v857 = vadd.f32 %v641, %v856
        %v858 = vpop.f32.mrb[0].mxu0
        %v859 = vadd.f32 %v645, %v858
        %860 = vmatprep.mubr.bf16.mxu0 0
        %861 = vmatmul.mubr.bf16.gmra.mrb[0].mxu0 %v614
        %v862 = vpop.f32.mrb[0].mxu0
        %v863 = vadd.f32 %v641, %v862
        %v864 = vpop.f32.mrb[0].mxu0
        %v865 = vadd.f32 %v645, %v864
        %v866 = vpop.f32.mrb[0].mxu0
        %v867 = vadd.f32 %v641, %v866
        %v868 = vpop.f32.mrb[0].mxu0
        %v869 = vadd.f32 %v645, %v868
        %870 = vmatprep.mubr.bf16.mxu0 0
        %871 = vmatmul.mubr.bf16.gmra.mrb[0].mxu0 %v615
        %v872 = vpop.f32.mrb[0].mxu0
        %v873 = vadd.f32 %v641, %v872
        %v874 = vpop.f32.mrb[0].mxu0
        %v875 = vadd.f32 %v645, %v874
        %v876 = vpop.f32.mrb[0].mxu0
        %v877 = vadd.f32 %v641, %v876
        %v878 = vpop.f32.mrb[0].mxu0
        %v879 = vadd.f32 %v645, %v878
        %880 = vmatprep.mubr.bf16.mxu0 0
        %881 = vmatmul.mubr.bf16.gmra.mrb[0].mxu0 %v616
        %v882 = vpop.f32.mrb[0].mxu0
        %v883 = vadd.f32 %v641, %v882
        %v884 = vpop.f32.mrb[0].mxu0
        %v885 = vadd.f32 %v645, %v884
        %v886 = vpop.f32.mrb[0].mxu0
        %v887 = vadd.f32 %v641, %v886
        %v888 = vpop.f32.mrb[0].mxu0
        %v889 = vadd.f32 %v645, %v888
        %890 = vmatprep.mubr.bf16.mxu0 0
        %891 = vmatmul.mubr.bf16.gmra.mrb[0].mxu0 %v617
        %v892 = vpop.f32.mrb[0].mxu0
        %v893 = vadd.f32 %v641, %v892
        %v894 = vpop.f32.mrb[0].mxu0
        %v895 = vadd.f32 %v645, %v894
        %v896 = vpop.f32.mrb[0].mxu0
        %v897 = vadd.f32 %v641, %v896
        %v898 = vpop.f32.mrb[0].mxu0
        %v899 = vadd.f32 %v645, %v898
        %900 = vmatprep.mubr.bf16.mxu0 0
        %901 = vmatmul.mubr.bf16.gmra.mrb[0].mxu0 %v618
        %v902 = vpop.f32.mrb[0].mxu0
        %v903 = vadd.f32 %v641, %v902
        %v904 = vpop.f32.mrb[0].mxu0
        %v905 = vadd.f32 %v645, %v904
        %v906 = vpop.f32.mrb[0].mxu0
        %v907 = vadd.f32 %v641, %v906
        %v908 = vpop.f32.mrb[0].mxu0
        %v909 = vadd.f32 %v645, %v908
        %910 = vmatprep.mubr.bf16.mxu0 0
        %911 = vmatmul.mubr.bf16.gmra.mrb[0].mxu0 %v619
        %v912 = vpop.f32.mrb[0].mxu0
        %v913 = vadd.f32 %v641, %v912
        %v914 = vpop.f32.mrb[0].mxu0
        %v915 = vadd.f32 %v645, %v914
        %v916 = vpop.f32.mrb[0].mxu0
        %v917 = vadd.f32 %v641, %v916
        %v918 = vpop.f32.mrb[0].mxu0
        %v919 = vadd.f32 %v645, %v918
        %920 = vdwg.mxu0
        %v921 = vmax.f32 %v763, 0.0
        %v922 = vmax.f32 %v765, 0.0
        %v923 = vmax.f32 %v767, 0.0
        %v924 = vmax.f32 %v769, 0.0
        %v925 = vmax.f32 %v773, 0.0
        %v926 = vmax.f32 %v775, 0.0
        %v927 = vmax.f32 %v777, 0.0
        %v928 = vmax.f32 %v779, 0.0
        %v929 = vmax.f32 %v783, 0.0
        %v930 = vmax.f32 %v785, 0.0
        %v931 = vmax.f32 %v787, 0.0
        %v932 = vmax.f32 %v789, 0.0
        %v933 = vmax.f32 %v793, 0.0
        %v934 = vmax.f32 %v795, 0.0
        %v935 = vmax.f32 %v797, 0.0
        %v936 = vmax.f32 %v799, 0.0
        %v937 = vmax.f32 %v803, 0.0
        %v938 = vmax.f32 %v805, 0.0
        %v939 = vmax.f32 %v807, 0.0
        %v940 = vmax.f32 %v809, 0.0
        %v941 = vmax.f32 %v813, 0.0
        %v942 = vmax.f32 %v815, 0.0
        %v943 = vmax.f32 %v817, 0.0
        %v944 = vmax.f32 %v819, 0.0
        %v945 = vmax.f32 %v823, 0.0
        %v946 = vmax.f32 %v825, 0.0
        %v947 = vmax.f32 %v827, 0.0
        %v948 = vmax.f32 %v829, 0.0
        %v949 = vmax.f32 %v833, 0.0
        %v950 = vmax.f32 %v835, 0.0
        %v951 = vmax.f32 %v837, 0.0
        %v952 = vmax.f32 %v839, 0.0
        %v953 = vmax.f32 %v843, 0.0
        %v954 = vmax.f32 %v845, 0.0
        %v955 = vmax.f32 %v847, 0.0
        %v956 = vmax.f32 %v849, 0.0
        %v957 = vmax.f32 %v853, 0.0
        %v958 = vmax.f32 %v855, 0.0
        %v959 = vmax.f32 %v857, 0.0
        %v960 = vmax.f32 %v859, 0.0
        %v961 = vmax.f32 %v863, 0.0
        %v962 = vmax.f32 %v865, 0.0
        %v963 = vmax.f32 %v867, 0.0
        %v964 = vmax.f32 %v869, 0.0
        %v965 = vmax.f32 %v873, 0.0
        %v966 = vmax.f32 %v875, 0.0
        %v967 = vmax.f32 %v877, 0.0
        %v968 = vmax.f32 %v879, 0.0
        %v969 = vmax.f32 %v883, 0.0
        %v970 = vmax.f32 %v885, 0.0
        %v971 = vmax.f32 %v887, 0.0
        %v972 = vmax.f32 %v889, 0.0
        %v973 = vmax.f32 %v893, 0.0
        %v974 = vmax.f32 %v895, 0.0
        %v975 = vmax.f32 %v897, 0.0
        %v976 = vmax.f32 %v899, 0.0
        %v977 = vmax.f32 %v903, 0.0
        %v978 = vmax.f32 %v905, 0.0
        %v979 = vmax.f32 %v907, 0.0
        %v980 = vmax.f32 %v909, 0.0
        %v981 = vmax.f32 %v913, 0.0
        %v982 = vmax.f32 %v915, 0.0
        %v983 = vmax.f32 %v917, 0.0
        %v984 = vmax.f32 %v919, 0.0
        %v985 = vpack.c.bf16 %v923, %v921
        %v986 = vpack.c.bf16 %v924, %v922
        %v987 = vpack.c.bf16 %v927, %v925
        %v988 = vpack.c.bf16 %v928, %v926
        %v989 = vpack.c.bf16 %v931, %v929
        %v990 = vpack.c.bf16 %v932, %v930
        %v991 = vpack.c.bf16 %v935, %v933
        %v992 = vpack.c.bf16 %v936, %v934
        %v993 = vpack.c.bf16 %v939, %v937
        %v994 = vpack.c.bf16 %v940, %v938
        %v995 = vpack.c.bf16 %v943, %v941
        %v996 = vpack.c.bf16 %v944, %v942
        %v997 = vpack.c.bf16 %v947, %v945
        %v998 = vpack.c.bf16 %v948, %v946
        %v999 = vpack.c.bf16 %v951, %v949
        %v1000 = vpack.c.bf16 %v952, %v950
        %v1001 = vpack.c.bf16 %v955, %v953
        %v1002 = vpack.c.bf16 %v956, %v954
        %v1003 = vpack.c.bf16 %v959, %v957
        %v1004 = vpack.c.bf16 %v960, %v958
        %v1005 = vpack.c.bf16 %v963, %v961
        %v1006 = vpack.c.bf16 %v964, %v962
        %v1007 = vpack.c.bf16 %v967, %v965
        %v1008 = vpack.c.bf16 %v968, %v966
        %v1009 = vpack.c.bf16 %v971, %v969
        %v1010 = vpack.c.bf16 %v972, %v970
        %v1011 = vpack.c.bf16 %v975, %v973
        %v1012 = vpack.c.bf16 %v976, %v974
        %v1013 = vpack.c.bf16 %v979, %v977
        %v1014 = vpack.c.bf16 %v980, %v978
        %v1015 = vpack.c.bf16 %v983, %v981
        %v1016 = vpack.c.bf16 %v984, %v982
        %v1049 = vunpack.c.l.b16 %v985
        %v1050 = vunpack.c.l.b16 %v986
        %v1051 = vunpack.c.h.b16 %v985
        %v1052 = vunpack.c.h.b16 %v986
        %v1053 = vunpack.c.l.b16 %v987
        %v1054 = vunpack.c.l.b16 %v988
        %v1055 = vunpack.c.h.b16 %v987
        %v1056 = vunpack.c.h.b16 %v988
        %v1057 = vunpack.c.l.b16 %v989
        %v1058 = vunpack.c.l.b16 %v990
        %v1059 = vunpack.c.h.b16 %v989
        %v1060 = vunpack.c.h.b16 %v990
        %v1061 = vunpack.c.l.b16 %v991
        %v1062 = vunpack.c.l.b16 %v992
        %v1063 = vunpack.c.h.b16 %v991
        %v1064 = vunpack.c.h.b16 %v992
        %v1065 = vunpack.c.l.b16 %v993
        %v1066 = vunpack.c.l.b16 %v994
        %v1067 = vunpack.c.h.b16 %v993
        %v1068 = vunpack.c.h.b16 %v994
        %v1069 = vunpack.c.l.b16 %v995
        %v1070 = vunpack.c.l.b16 %v996
        %v1071 = vunpack.c.h.b16 %v995
        %v1072 = vunpack.c.h.b16 %v996
        %v1073 = vunpack.c.l.b16 %v997
        %v1074 = vunpack.c.l.b16 %v998
        %v1075 = vunpack.c.h.b16 %v997
        %v1076 = vunpack.c.h.b16 %v998
        %v1077 = vunpack.c.l.b16 %v999
        %v1078 = vunpack.c.l.b16 %v1000
        %v1079 = vunpack.c.h.b16 %v999
        %v1080 = vunpack.c.h.b16 %v1000
        %v1081 = vunpack.c.l.b16 %v1001
        %v1082 = vunpack.c.l.b16 %v1002
        %v1083 = vunpack.c.h.b16 %v1001
        %v1084 = vunpack.c.h.b16 %v1002
        %v1085 = vunpack.c.l.b16 %v1003
        %v1086 = vunpack.c.l.b16 %v1004
        %v1087 = vunpack.c.h.b16 %v1003
        %v1088 = vunpack.c.h.b16 %v1004
        %v1089 = vunpack.c.l.b16 %v1005
        %v1090 = vunpack.c.l.b16 %v1006
        %v1091 = vunpack.c.h.b16 %v1005
        %v1092 = vunpack.c.h.b16 %v1006
        %v1093 = vunpack.c.l.b16 %v1007
        %v1094 = vunpack.c.l.b16 %v1008
        %v1095 = vunpack.c.h.b16 %v1007
        %v1096 = vunpack.c.h.b16 %v1008
        %v1097 = vunpack.c.l.b16 %v1009
        %v1098 = vunpack.c.l.b16 %v1010
        %v1099 = vunpack.c.h.b16 %v1009
        %v1100 = vunpack.c.h.b16 %v1010
        %v1101 = vunpack.c.l.b16 %v1011
        %v1102 = vunpack.c.l.b16 %v1012
        %v1103 = vunpack.c.h.b16 %v1011
        %v1104 = vunpack.c.h.b16 %v1012
        %v1105 = vunpack.c.l.b16 %v1013
        %v1106 = vunpack.c.l.b16 %v1014
        %v1107 = vunpack.c.h.b16 %v1013
        %v1108 = vunpack.c.h.b16 %v1014
        %v1109 = vunpack.c.l.b16 %v1015
        %v1110 = vunpack.c.l.b16 %v1016
        %v1111 = vunpack.c.h.b16 %v1015
        %v1112 = vunpack.c.h.b16 %v1016
        %v1113 = vpack.c.b16 %v1050, %v1049
        %v1114 = vpack.c.b16 %v1052, %v1051
        %v1115 = vpack.c.b16 %v1054, %v1053
        %v1116 = vpack.c.b16 %v1056, %v1055
        %v1117 = vpack.c.b16 %v1058, %v1057
        %v1118 = vpack.c.b16 %v1060, %v1059
        %v1119 = vpack.c.b16 %v1062, %v1061
        %v1120 = vpack.c.b16 %v1064, %v1063
        %v1121 = vpack.c.b16 %v1066, %v1065
        %v1122 = vpack.c.b16 %v1068, %v1067
        %v1123 = vpack.c.b16 %v1070, %v1069
        %v1124 = vpack.c.b16 %v1072, %v1071
        %v1125 = vpack.c.b16 %v1074, %v1073
        %v1126 = vpack.c.b16 %v1076, %v1075
        %v1127 = vpack.c.b16 %v1078, %v1077
        %v1128 = vpack.c.b16 %v1080, %v1079
        %v1129 = vpack.c.b16 %v1082, %v1081
        %v1130 = vpack.c.b16 %v1084, %v1083
        %v1131 = vpack.c.b16 %v1086, %v1085
        %v1132 = vpack.c.b16 %v1088, %v1087
        %v1133 = vpack.c.b16 %v1090, %v1089
        %v1134 = vpack.c.b16 %v1092, %v1091
        %v1135 = vpack.c.b16 %v1094, %v1093
        %v1136 = vpack.c.b16 %v1096, %v1095
        %v1137 = vpack.c.b16 %v1098, %v1097
        %v1138 = vpack.c.b16 %v1100, %v1099
        %v1139 = vpack.c.b16 %v1102, %v1101
        %v1140 = vpack.c.b16 %v1104, %v1103
        %v1141 = vpack.c.b16 %v1106, %v1105
        %v1142 = vpack.c.b16 %v1108, %v1107
        %v1143 = vpack.c.b16 %v1110, %v1109
        %v1144 = vpack.c.b16 %v1112, %v1111
        %1177 = vst [vmem:[%s218] sm:$0xff] %v1113
        %1178 = vst [vmem:[%s218 + $0x8] sm:$0xff] %v1114
        %1179 = vst [vmem:[%s218 + $0x10] sm:$0xff] %v1115
        %1180 = vst [vmem:[%s218 + $0x18] sm:$0xff] %v1116
        %1181 = vst [vmem:[%s218 + $0x20] sm:$0xff] %v1117
        %1182 = vst [vmem:[%s218 + $0x28] sm:$0xff] %v1118
        %1183 = vst [vmem:[%s218 + $0x30] sm:$0xff] %v1119
        %1184 = vst [vmem:[%s218 + $0x38] sm:$0xff] %v1120
        %1185 = vst [vmem:[%s218 + $0x40] sm:$0xff] %v1121
        %1186 = vst [vmem:[%s218 + $0x48] sm:$0xff] %v1122
        %1187 = vst [vmem:[%s218 + $0x50] sm:$0xff] %v1123
        %1188 = vst [vmem:[%s218 + $0x58] sm:$0xff] %v1124
        %1189 = vst [vmem:[%s218 + $0x60] sm:$0xff] %v1125
        %1190 = vst [vmem:[%s218 + $0x68] sm:$0xff] %v1126
        %1191 = vst [vmem:[%s218 + $0x70] sm:$0xff] %v1127
        %1192 = vst [vmem:[%s218 + $0x78] sm:$0xff] %v1128
        %1193 = vst [vmem:[%s218 + $0x80] sm:$0xff] %v1129
        %1194 = vst [vmem:[%s218 + $0x88] sm:$0xff] %v1130
        %1195 = vst [vmem:[%s218 + $0x90] sm:$0xff] %v1131
        %1196 = vst [vmem:[%s218 + $0x98] sm:$0xff] %v1132
        %1197 = vst [vmem:[%s218 + $0xa0] sm:$0xff] %v1133
        %1198 = vst [vmem:[%s218 + $0xa8] sm:$0xff] %v1134
        %1199 = vst [vmem:[%s218 + $0xb0] sm:$0xff] %v1135
        %1200 = vst [vmem:[%s218 + $0xb8] sm:$0xff] %v1136
        %1201 = vst [vmem:[%s218 + $0xc0] sm:$0xff] %v1137
        %1202 = vst [vmem:[%s218 + $0xc8] sm:$0xff] %v1138
        %1203 = vst [vmem:[%s218 + $0xd0] sm:$0xff] %v1139
        %1204 = vst [vmem:[%s218 + $0xd8] sm:$0xff] %v1140
        %1205 = vst [vmem:[%s218 + $0xe0] sm:$0xff] %v1141
        %1206 = vst [vmem:[%s218 + $0xe8] sm:$0xff] %v1142
        %1207 = vst [vmem:[%s218 + $0xf0] sm:$0xff] %v1143
        %1208 = vst [vmem:[%s218 + $0xf8] sm:$0xff] %v1144
        %s1209 = sand.u32 %s137, 1
        %s1210 = scalar_lea.sflag [#allocation3], %s1209
        %s1211 = sand.u32 %s137, 1
        %s1212 = smul.addr %s1211, 256
        %s1213 = scalar_lea.vmem [#allocation2], %s1212
        // Predicated region
        $region41: #{tpu_custom_call.1} parent=39 // pred_check
          %p1214 = pneg %p147
        $region42: #{tpu_custom_call.1} parent=39 // pred_check_branch
          %1216 = sbr.rel (%p1214) target = $region44
        $region43: #{tpu_custom_call.1} parent=39 // pred_region
          %s1217 = smul.u32 32, %s19
          %s1219 = ssub.s32 4096, 4096
          %1220 = vsyncadd %s1210, %s1219
          %s1221 = smul.addr %s1217, 2
          %s1222 = smul.addr %s1221, 64
          %s1223 = scalar_lea.hbm %s5, %s1222
          %s1224 = sshll.u32 %s1213, 4
          %s1225 = int_to_ptr.vmem [resolvable:$true] %s1224
          %1230 = dma.vmem_to_hbm [thread:$0]  %s1225, 4096, %s1223, %s1210, 128, 128, 8
        $region44: #{tpu_custom_call.1} parent=39 // pred_fallthru
          _
      $region40: #{tpu_custom_call.1} parent=5 // pred_fallthru
        _
      %p1231 = scmp.le.s32.totalorder 2, %s14
      // Predicated region
      $region45: #{tpu_custom_call.1} parent=5 // pred_check
        %p1232 = pneg %p1231
      $region46: #{tpu_custom_call.1} parent=5 // pred_check_branch
        %1234 = sbr.rel (%p1232) target = $region48
      $region47: #{tpu_custom_call.1} parent=5 // pred_region
        %s1235 = ssub.s32 %s14, 2
        // Predicated region
        $region49: #{tpu_custom_call.1} parent=47 // pred_check
          %p1236 = pneg %p153
        $region50: #{tpu_custom_call.1} parent=47 // pred_check_branch
          %1238 = sbr.rel (%p1236) target = $region52
        $region51: #{tpu_custom_call.1} parent=47 // pred_region
          %s1239 = sand.u32 %s138, 1
          %s1240 = scalar_lea.sflag [#allocation3], %s1239
          %s1241 = sand.u32 %s138, 1
          %s1242 = smul.addr %s1241, 256
          %s1243 = scalar_lea.vmem [#allocation2], %s1242
          %1244 = dma.done %s1240, 4096
        $region52: #{tpu_custom_call.1} parent=47 // pred_fallthru
          _
      $region48: #{tpu_custom_call.1} parent=5 // pred_fallthru
        _
    $region6: #{tpu_custom_call.1} parent=1 // loop_footer
      %s18 = sadd.s32 1, %s14
    $region7: #{tpu_custom_call.1} parent=1 // loop_footer_branch
      %13 = sbr.rel target = $region3
    $region8: #{tpu_custom_call.1} parent=1 // loop_exit
      _
    %1245 = vsyncpa [#allocation3], 1
    %s1246 = scalar_lea.sflag [#allocation3], 1
    %1247 = vsyncpa %s1246, 1

</llo_original>
